<compile_context>
chip_gen: v6e
topology: v6e:2x2x1
jax: 0.10.0
libtpu: 0.0.40
codegen_flags: <defaults>
</compile_context>

<pallas_src>
import functools
import math

import jax
import jax.numpy as jnp
from jax.experimental import pallas as pl
from jax.experimental.pallas import tpu as pltpu

SELU_ALPHA = 1.6732632423543772848170429916717
SELU_SCALE = 1.0507009873554804934193349852946
PAD = 128  # lane width; all feature axes are zero-padded to this


def _selu(x):
    # exp() only on the non-positive branch value -> no inf on the unselected side.
    return SELU_SCALE * jnp.where(
        x > 0, x, SELU_ALPHA * (jnp.exp(jnp.minimum(x, 0.0)) - 1.0))


def sinusoidal_embedding(t, dim, max_period=10000.0):
    """t: (B, 1) -> (B, dim). Matches timestep_sinusoidal_embedding."""
    half = dim // 2
    freqs = jnp.exp(
        -jnp.log(jnp.float32(max_period)) * jnp.arange(half, dtype=jnp.float32) / half)
    args = t.astype(jnp.float32) * freqs[None, :]                       # (B, half)
    emb = jnp.concatenate([jnp.cos(args), jnp.sin(args)], axis=-1)      # (B, 2*half)
    if dim % 2:
        emb = jnp.concatenate([emb, jnp.zeros_like(emb[:, :1])], axis=-1)
    return emb


def deepsets_kernel(x_ref, w_ref, b_ref, o_ref, *, n_set, tile_b):
    """One row tile of tile_b complete sets (tile_b * n_set points).

    x_ref: (TR, 128)      rows = [x | t_emb | 0-pad] per point, TR = tile_b*n_set
    w_ref: (7, 128, 128)  [w1, w2, w3, v1h, v1p, v2, v3], zero-padded (in, out)
    b_ref: (6, 1, 128)    [b1, b2, b3, c1, c2, c3], zero-padded
    o_ref: (TR, 128)      cols 0..F-1 are the real output, rest garbage-free zero-pad
    """
    tr = tile_b * n_set
    x = x_ref[...]                                                      # (TR, 128)

    def mm(a, k):
        # Cast lhs to the weight dtype (bf16 MXU path on v5e/v6e/v7x), accumulate f32.
        return jnp.dot(a.astype(w_ref.dtype), w_ref[k],
                       preferred_element_type=jnp.float32)

    # ---- phi MLP: Linear+SELU, Linear+SELU(+dropout=identity), Linear ----
    h = _selu(mm(x, 0) + b_ref[0])
    h = _selu(mm(h, 1) + b_ref[1])
    h = mm(h, 2) + b_ref[2]                                             # (TR, 128)

    # ---- permutation-invariant sum pooling per set ----
    # Reshape + sublane reduce (VPU/XLU; linear in TR) instead of pooling matmuls.
    h_pool = jnp.sum(h.reshape(tile_b, n_set, PAD), axis=1)             # (TB, 128)

    # ---- rho MLP on [h, h_pool] (concat folded into a split first matmul) ----
    # Associativity reorder: multiply the pooled branch at TB rows, then broadcast
    # the (TB,128) result back to every row of its set (cheap sublane broadcast).
    hp_w = mm(h_pool, 4) + b_ref[3]                                     # (TB, 128)
    hp_rows = jnp.broadcast_to(
        hp_w[:, None, :], (tile_b, n_set, PAD)).reshape(tr, PAD)        # (TR, 128)

    r = _selu(mm(h, 3) + hp_rows)
    r = _selu(mm(r, 5) + b_ref[4])
    o_ref[...] = mm(r, 6) + b_ref[5]                                    # lane-dense store


def init_params(key, dim_features, dim_time_emb, dim_hidden):
    """PyTorch-Linear-style deterministic init; weights stored as (in, out)."""
    def lin(k, fan_in, fan_out):
        k1, k2 = jax.random.split(k)
        bound = 1.0 / jnp.sqrt(jnp.float32(fan_in))
        W = jax.random.uniform(k1, (fan_in, fan_out), jnp.float32, -bound, bound)
        b = jax.random.uniform(k2, (1, fan_out), jnp.float32, -bound, bound)
        return W, b

    F, Dt, H = dim_features, dim_time_emb, dim_hidden
    ks = jax.random.split(key, 6)
    w1, b1 = lin(ks[0], F + Dt, H)       # phi layer 1 (input = [x, t_emb])
    w2, b2 = lin(ks[1], H, H)            # phi layer 2
    w3, b3 = lin(ks[2], H, H)            # phi layer 3 (dim_output = dim_hidden)
    v1, c1 = lin(ks[3], 2 * H, H)        # rho layer 1 (input = [h, h_pool])
    v2, c2 = lin(ks[4], H, H)            # rho layer 2
    v3, c3 = lin(ks[5], H, F)            # rho layer 3 (dim_output = dim_features)
    return dict(w1=w1, b1=b1, w2=w2, b2=b2, w3=w3, b3=b3,
                v1=v1, c1=c1, v2=v2, c2=c2, v3=v3, c3=c3)


def _pad2(a):
    return jnp.zeros((PAD, PAD), jnp.float32).at[:a.shape[0], :a.shape[1]].set(a)


def _padb(a):
    a = a.reshape(1, -1)
    return jnp.zeros((1, PAD), jnp.float32).at[:, :a.shape[1]].set(a)


def prepare_slabs(params, mxu_dtype=jnp.float32):
    """Coalesced, zero-padded weight/bias slabs.  Build ONCE and reuse across calls
    (hoisted out of the jit'd forward; rebuilding per call is pure wrapper overhead).
    """
    H = params["w2"].shape[0]
    v1 = params["v1"]
    w_slab = jnp.stack([
        _pad2(params["w1"]), _pad2(params["w2"]), _pad2(params["w3"]),
        _pad2(v1[:H]), _pad2(v1[H:]), _pad2(params["v2"]), _pad2(params["v3"]),
    ]).astype(mxu_dtype)                                                 # (7,128,128)
    b_slab = jnp.stack([
        _padb(params["b1"]), _padb(params["b2"]), _padb(params["b3"]),
        _padb(params["c1"]), _padb(params["c2"]), _padb(params["c3"]),
    ])                                                                   # (6,1,128)
    return w_slab, b_slab


def _pick_tile(batch, n_set, target_rows=1024, min_grid=2):
    """Pick tile_b (sets per tile) and the padded batch.

    Guarantees tile_rows = tile_b*n_set is a multiple of 8 (sublane-clean) by
    padding whole sets, targets ~target_rows rows per tile, and caps tile_b so
    the grid has >= min_grid steps when the batch allows (v7x has 2 TensorCores
    that shard "parallel" grid axes).
    """
    step = 8 // math.gcd(n_set, 8)               # smallest sublane-clean tile_b
    b_ceil = -(-batch // step) * step            # batch rounded up to step
    tb = max(step, (target_rows // (n_set * step)) * step)
    tb = min(tb, b_ceil)                         # never bigger than the problem
    if b_ceil >= min_grid * step:
        tb = min(tb, max(step, (b_ceil // min_grid // step) * step))
    b_pad = -(-batch // tb) * tb                 # pad batch to a multiple of tb
    return tb, b_pad


@functools.partial(jax.jit, static_argnames=("dim_time_emb",))
def deepsets_apply(w_slab, b_slab, t, x, *, dim_time_emb):
    B, N, F = x.shape
    Dt = dim_time_emb
    rows = B * N

    tile_b, b_pad = _pick_tile(B, N)
    tile_rows = tile_b * N
    rows_pad = b_pad * N
    grid = (b_pad // tile_b,)

    # ---- plain-JAX glue: time embedding + lane-padded flattened input ----
    # Padded rows (whole sets of zeros) never contaminate real sets: pooling is
    # per-set inside the tile, and tile boundaries align with set boundaries.
    t_emb = sinusoidal_embedding(t, Dt)                                  # (B, Dt)
    x_in = jnp.zeros((rows_pad, PAD), jnp.float32)
    x_in = x_in.at[:rows, :F].set(x.reshape(rows, F).astype(jnp.float32))
    x_in = x_in.at[:rows, F:F + Dt].set(jnp.repeat(t_emb, N, axis=0))

    # Advisory cost estimate: 6 TR-row matmuls + 1 TB-row matmul per tile, 4 SELUs.
    itemsize = jnp.dtype(w_slab.dtype).itemsize
    cost = pl.CostEstimate(
        flops=2 * rows_pad * PAD * PAD * 6 + 2 * b_pad * PAD * PAD,
        transcendentals=rows_pad * PAD * 4,
        bytes_accessed=(2 * rows_pad * PAD * 4
                        + 7 * PAD * PAD * itemsize + 6 * PAD * 4))

    # TODO(synk): for large batches the (rows,128) padded input/output slabs carry
    # ~10x/43x more HBM bytes than the real 13/3 columns; pack a whole set per
    # 128-lane row (N*(F+Dt)=104, N*F=24 both fit) if this ever becomes HBM-bound.
    out_padded = pl.pallas_call(
        functools.partial(deepsets_kernel, n_set=N, tile_b=tile_b),
        out_shape=jax.ShapeDtypeStruct((rows_pad, PAD), jnp.float32),
        grid=grid,
        in_specs=[
            pl.BlockSpec((tile_rows, PAD), lambda i: (i, 0)),
            # Grid-invariant weight/bias slabs: single-buffered (no wasted VMEM copy).
            pl.BlockSpec((7, PAD, PAD), lambda i: (0, 0, 0),
                         pipeline_mode=pl.Buffered(1)),
            pl.BlockSpec((6, 1, PAD), lambda i: (0, 0, 0),
                         pipeline_mode=pl.Buffered(1)),
        ],
        out_specs=pl.BlockSpec((tile_rows, PAD), lambda i: (i, 0)),
        compiler_params=pltpu.CompilerParams(dimension_semantics=("parallel",)),
        cost_estimate=cost,
    )(x_in, w_slab, b_slab)

    return out_padded[:rows, :F].reshape(B, N, F)


def deepsets_forward(params, t, x, dim_time_emb, mxu_dtype=jnp.float32):
    """Convenience wrapper (prepares slabs per call; prefer prepare_slabs + apply)."""
    w_slab, b_slab = prepare_slabs(params, mxu_dtype)
    return deepsets_apply(w_slab, b_slab, t, x, dim_time_emb=dim_time_emb)


def deepsets_reference(params, t, x, dim_time_emb):
    """Pure-JAX reference for correctness checking."""
    B, N, F = x.shape
    te = sinusoidal_embedding(t, dim_time_emb)[:, None, :]               # (B, 1, Dt)
    xt = jnp.concatenate([x, jnp.broadcast_to(te, (B, N, te.shape[-1]))], axis=-1)
    h = _selu(xt @ params["w1"] + params["b1"])
    h = _selu(h @ params["w2"] + params["b2"])
    h = h @ params["w3"] + params["b3"]
    h_pool = jnp.sum(h, axis=1, keepdims=True)                           # pool='sum'
    enh = jnp.concatenate([h, jnp.broadcast_to(h_pool, h.shape)], axis=-1)
    r = _selu(enh @ params["v1"] + params["c1"])
    r = _selu(r @ params["v2"] + params["c2"])
    return r @ params["v3"] + params["c3"]


if __name__ == "__main__":
    # Small shapes consistent with the module's forward:
    B, N = 2, 8                 # batch, set size (particles)
    DIM_FEATURES = 3            # config.DIM_INPUT
    DIM_HIDDEN = 32             # config.DIM_HIDDEN
    DIM_TIME_EMB = 10           # config.DIM_TIME_EMB
    # TODO(synk): dropout(p=0.1) inside fc_block is inference-mode identity here;
    # only the default pool='sum' + sinusoidal time embedding paths are implemented.

    key = jax.random.PRNGKey(0)
    k_p, k_x, k_t = jax.random.split(key, 3)
    params = init_params(k_p, DIM_FEATURES, DIM_TIME_EMB, DIM_HIDDEN)
    x = jax.random.normal(k_x, (B, N, DIM_FEATURES), dtype=jnp.float32)
    t = jax.random.uniform(k_t, (B, 1), dtype=jnp.float32)

    ref = deepsets_reference(params, t, x, DIM_TIME_EMB)

    # f32 MXU path (matches reference).  Slabs prepared once, reused across calls.
    w_f32, b_f32 = prepare_slabs(params, jnp.float32)
    out = jax.block_until_ready(
        deepsets_apply(w_f32, b_f32, t, x, dim_time_emb=DIM_TIME_EMB))
    assert out.shape == (B, N, DIM_FEATURES)
    assert jnp.allclose(out, ref, atol=1e-5, rtol=1e-5), "mismatch vs JAX reference"

    # bf16 MXU path (native on v5e/v6e/v7x); f32 accumulation, loose bf16 tolerance.
    w_bf16, b_bf16 = prepare_slabs(params, jnp.bfloat16)
    out_bf16 = jax.block_until_ready(
        deepsets_apply(w_bf16, b_bf16, t, x, dim_time_emb=DIM_TIME_EMB))
    assert jnp.allclose(out_bf16, ref, atol=1e-1, rtol=1e-1), "bf16 path mismatch"

    print("KERNEL_OK")
</pallas_src>

<mosaic_0001>
module attributes {stable_mosaic.version = 11 : i64} {
  func.func @deepsets_kernel(%arg0: i32, %arg1: memref<8x128xf32, #tpu.memory_space<vmem>>, %arg2: memref<7x128x128xf32, #tpu.memory_space<vmem>>, %arg3: memref<6x1x128xf32, #tpu.memory_space<vmem>>, %arg4: memref<8x128xf32, #tpu.memory_space<vmem>>) attributes {dimension_semantics = [#tpu.dimension_semantics<parallel>], iteration_bounds = array<i64: 2>, scalar_prefetch = 0 : i64, scratch_operands = 0 : i64, tpu.core_type = #tpu.core_type<tc>, window_params = [{transform_indices = @transform_0, window_bounds = array<i64: 8, 128>}, {pipeline_mode = #tpu.pipeline_mode<synchronous>, transform_indices = @transform_1, window_bounds = array<i64: 7, 128, 128>}, {pipeline_mode = #tpu.pipeline_mode<synchronous>, transform_indices = @transform_2, window_bounds = array<i64: 6, 1, 128>}, {transform_indices = @transform_3, window_bounds = array<i64: 8, 128>}]} {
    %c0 = arith.constant 0 : index
    %c0_0 = arith.constant 0 : index
    %0 = vector.load %arg1[%c0, %c0_0] : memref<8x128xf32, #tpu.memory_space<vmem>>, vector<8x128xf32>
    %c0_1 = arith.constant 0 : index
    %c0_2 = arith.constant 0 : index
    %c0_3 = arith.constant 0 : index
    %1 = vector.load %arg2[%c0_1, %c0_2, %c0_3] : memref<7x128x128xf32, #tpu.memory_space<vmem>>, vector<1x128x128xf32>
    %2 = vector.shape_cast %1 : vector<1x128x128xf32> to vector<128x128xf32>
    %cst = arith.constant dense<0.000000e+00> : vector<8x128xf32>
    %3 = tpu.matmul %0, %2, %cst {dimension_numbers = #tpu.dot_dimension_numbers<[1], [0], [0], [1], [0, 0, 1, 1], [], []>} : vector<8x128xf32>, vector<128x128xf32>, vector<8x128xf32> -> vector<8x128xf32>
    %c0_4 = arith.constant 0 : index
    %c0_5 = arith.constant 0 : index
    %c0_6 = arith.constant 0 : index
    %4 = vector.load %arg3[%c0_4, %c0_5, %c0_6] : memref<6x1x128xf32, #tpu.memory_space<vmem>>, vector<1x1x128xf32>
    %5 = vector.shape_cast %4 : vector<1x1x128xf32> to vector<1x128xf32>
    %6 = vector.broadcast %5 : vector<1x128xf32> to vector<8x128xf32>
    %7 = arith.addf %3, %6 : vector<8x128xf32>
    %cst_7 = arith.constant 0.000000e+00 : f32
    %8 = vector.broadcast %cst_7 : f32 to vector<8x128xf32>
    %9 = arith.cmpf ogt, %7, %8 : vector<8x128xf32>
    %cst_8 = arith.constant 0.000000e+00 : f32
    %10 = vector.broadcast %cst_8 : f32 to vector<8x128xf32>
    %11 = arith.minimumf %7, %10 : vector<8x128xf32>
    %12 = math.exp %11 : vector<8x128xf32>
    %cst_9 = arith.constant 1.000000e+00 : f32
    %13 = vector.broadcast %cst_9 : f32 to vector<8x128xf32>
    %14 = arith.subf %12, %13 : vector<8x128xf32>
    %cst_10 = arith.constant 1.67326319 : f32
    %15 = vector.broadcast %cst_10 : f32 to vector<8x128xf32>
    %16 = arith.mulf %15, %14 : vector<8x128xf32>
    %17 = arith.select %9, %7, %16 : vector<8x128xi1>, vector<8x128xf32>
    %cst_11 = arith.constant 1.05070102 : f32
    %18 = vector.broadcast %cst_11 : f32 to vector<8x128xf32>
    %19 = arith.mulf %18, %17 : vector<8x128xf32>
    %c1 = arith.constant 1 : index
    %c0_12 = arith.constant 0 : index
    %c0_13 = arith.constant 0 : index
    %20 = vector.load %arg2[%c1, %c0_12, %c0_13] : memref<7x128x128xf32, #tpu.memory_space<vmem>>, vector<1x128x128xf32>
    %21 = vector.shape_cast %20 : vector<1x128x128xf32> to vector<128x128xf32>
    %cst_14 = arith.constant dense<0.000000e+00> : vector<8x128xf32>
    %22 = tpu.matmul %19, %21, %cst_14 {dimension_numbers = #tpu.dot_dimension_numbers<[1], [0], [0], [1], [0, 0, 1, 1], [], []>} : vector<8x128xf32>, vector<128x128xf32>, vector<8x128xf32> -> vector<8x128xf32>
    %c1_15 = arith.constant 1 : index
    %c0_16 = arith.constant 0 : index
    %c0_17 = arith.constant 0 : index
    %23 = vector.load %arg3[%c1_15, %c0_16, %c0_17] : memref<6x1x128xf32, #tpu.memory_space<vmem>>, vector<1x1x128xf32>
    %24 = vector.shape_cast %23 : vector<1x1x128xf32> to vector<1x128xf32>
    %25 = vector.broadcast %24 : vector<1x128xf32> to vector<8x128xf32>
    %26 = arith.addf %22, %25 : vector<8x128xf32>
    %cst_18 = arith.constant 0.000000e+00 : f32
    %27 = vector.broadcast %cst_18 : f32 to vector<8x128xf32>
    %28 = arith.cmpf ogt, %26, %27 : vector<8x128xf32>
    %cst_19 = arith.constant 0.000000e+00 : f32
    %29 = vector.broadcast %cst_19 : f32 to vector<8x128xf32>
    %30 = arith.minimumf %26, %29 : vector<8x128xf32>
    %31 = math.exp %30 : vector<8x128xf32>
    %cst_20 = arith.constant 1.000000e+00 : f32
    %32 = vector.broadcast %cst_20 : f32 to vector<8x128xf32>
    %33 = arith.subf %31, %32 : vector<8x128xf32>
    %cst_21 = arith.constant 1.67326319 : f32
    %34 = vector.broadcast %cst_21 : f32 to vector<8x128xf32>
    %35 = arith.mulf %34, %33 : vector<8x128xf32>
    %36 = arith.select %28, %26, %35 : vector<8x128xi1>, vector<8x128xf32>
    %cst_22 = arith.constant 1.05070102 : f32
    %37 = vector.broadcast %cst_22 : f32 to vector<8x128xf32>
    %38 = arith.mulf %37, %36 : vector<8x128xf32>
    %c2 = arith.constant 2 : index
    %c0_23 = arith.constant 0 : index
    %c0_24 = arith.constant 0 : index
    %39 = vector.load %arg2[%c2, %c0_23, %c0_24] : memref<7x128x128xf32, #tpu.memory_space<vmem>>, vector<1x128x128xf32>
    %40 = vector.shape_cast %39 : vector<1x128x128xf32> to vector<128x128xf32>
    %cst_25 = arith.constant dense<0.000000e+00> : vector<8x128xf32>
    %41 = tpu.matmul %38, %40, %cst_25 {dimension_numbers = #tpu.dot_dimension_numbers<[1], [0], [0], [1], [0, 0, 1, 1], [], []>} : vector<8x128xf32>, vector<128x128xf32>, vector<8x128xf32> -> vector<8x128xf32>
    %c2_26 = arith.constant 2 : index
    %c0_27 = arith.constant 0 : index
    %c0_28 = arith.constant 0 : index
    %42 = vector.load %arg3[%c2_26, %c0_27, %c0_28] : memref<6x1x128xf32, #tpu.memory_space<vmem>>, vector<1x1x128xf32>
    %43 = vector.shape_cast %42 : vector<1x1x128xf32> to vector<1x128xf32>
    %44 = vector.broadcast %43 : vector<1x128xf32> to vector<8x128xf32>
    %45 = arith.addf %41, %44 : vector<8x128xf32>
    %46 = vector.shape_cast %45 : vector<8x128xf32> to vector<1x8x128xf32>
    %cst_29 = arith.constant dense<0.000000e+00> : vector<1x128xf32>
    %47 = vector.multi_reduction <add>, %46, %cst_29 [1] : vector<1x8x128xf32> to vector<1x128xf32>
    %c4 = arith.constant 4 : index
    %c0_30 = arith.constant 0 : index
    %c0_31 = arith.constant 0 : index
    %48 = vector.load %arg2[%c4, %c0_30, %c0_31] : memref<7x128x128xf32, #tpu.memory_space<vmem>>, vector<1x128x128xf32>
    %49 = vector.shape_cast %48 : vector<1x128x128xf32> to vector<128x128xf32>
    %cst_32 = arith.constant dense<0.000000e+00> : vector<1x128xf32>
    %50 = tpu.matmul %47, %49, %cst_32 {dimension_numbers = #tpu.dot_dimension_numbers<[1], [0], [0], [1], [0, 0, 1, 1], [], []>} : vector<1x128xf32>, vector<128x128xf32>, vector<1x128xf32> -> vector<1x128xf32>
    %c3 = arith.constant 3 : index
    %c0_33 = arith.constant 0 : index
    %c0_34 = arith.constant 0 : index
    %51 = vector.load %arg3[%c3, %c0_33, %c0_34] : memref<6x1x128xf32, #tpu.memory_space<vmem>>, vector<1x1x128xf32>
    %52 = vector.shape_cast %51 : vector<1x1x128xf32> to vector<1x128xf32>
    %53 = arith.addf %50, %52 : vector<1x128xf32>
    %54 = vector.shape_cast %53 : vector<1x128xf32> to vector<1x1x128xf32>
    %55 = vector.shape_cast %54 : vector<1x1x128xf32> to vector<1x1x128xf32>
    %56 = vector.broadcast %55 : vector<1x1x128xf32> to vector<1x8x128xf32>
    %57 = vector.shape_cast %56 : vector<1x8x128xf32> to vector<8x128xf32>
    %c3_35 = arith.constant 3 : index
    %c0_36 = arith.constant 0 : index
    %c0_37 = arith.constant 0 : index
    %58 = vector.load %arg2[%c3_35, %c0_36, %c0_37] : memref<7x128x128xf32, #tpu.memory_space<vmem>>, vector<1x128x128xf32>
    %59 = vector.shape_cast %58 : vector<1x128x128xf32> to vector<128x128xf32>
    %cst_38 = arith.constant dense<0.000000e+00> : vector<8x128xf32>
    %60 = tpu.matmul %45, %59, %cst_38 {dimension_numbers = #tpu.dot_dimension_numbers<[1], [0], [0], [1], [0, 0, 1, 1], [], []>} : vector<8x128xf32>, vector<128x128xf32>, vector<8x128xf32> -> vector<8x128xf32>
    %61 = arith.addf %60, %57 : vector<8x128xf32>
    %cst_39 = arith.constant 0.000000e+00 : f32
    %62 = vector.broadcast %cst_39 : f32 to vector<8x128xf32>
    %63 = arith.cmpf ogt, %61, %62 : vector<8x128xf32>
    %cst_40 = arith.constant 0.000000e+00 : f32
    %64 = vector.broadcast %cst_40 : f32 to vector<8x128xf32>
    %65 = arith.minimumf %61, %64 : vector<8x128xf32>
    %66 = math.exp %65 : vector<8x128xf32>
    %cst_41 = arith.constant 1.000000e+00 : f32
    %67 = vector.broadcast %cst_41 : f32 to vector<8x128xf32>
    %68 = arith.subf %66, %67 : vector<8x128xf32>
    %cst_42 = arith.constant 1.67326319 : f32
    %69 = vector.broadcast %cst_42 : f32 to vector<8x128xf32>
    %70 = arith.mulf %69, %68 : vector<8x128xf32>
    %71 = arith.select %63, %61, %70 : vector<8x128xi1>, vector<8x128xf32>
    %cst_43 = arith.constant 1.05070102 : f32
    %72 = vector.broadcast %cst_43 : f32 to vector<8x128xf32>
    %73 = arith.mulf %72, %71 : vector<8x128xf32>
    %c5 = arith.constant 5 : index
    %c0_44 = arith.constant 0 : index
    %c0_45 = arith.constant 0 : index
    %74 = vector.load %arg2[%c5, %c0_44, %c0_45] : memref<7x128x128xf32, #tpu.memory_space<vmem>>, vector<1x128x128xf32>
    %75 = vector.shape_cast %74 : vector<1x128x128xf32> to vector<128x128xf32>
    %cst_46 = arith.constant dense<0.000000e+00> : vector<8x128xf32>
    %76 = tpu.matmul %73, %75, %cst_46 {dimension_numbers = #tpu.dot_dimension_numbers<[1], [0], [0], [1], [0, 0, 1, 1], [], []>} : vector<8x128xf32>, vector<128x128xf32>, vector<8x128xf32> -> vector<8x128xf32>
    %c4_47 = arith.constant 4 : index
    %c0_48 = arith.constant 0 : index
    %c0_49 = arith.constant 0 : index
    %77 = vector.load %arg3[%c4_47, %c0_48, %c0_49] : memref<6x1x128xf32, #tpu.memory_space<vmem>>, vector<1x1x128xf32>
    %78 = vector.shape_cast %77 : vector<1x1x128xf32> to vector<1x128xf32>
    %79 = vector.broadcast %78 : vector<1x128xf32> to vector<8x128xf32>
    %80 = arith.addf %76, %79 : vector<8x128xf32>
    %cst_50 = arith.constant 0.000000e+00 : f32
    %81 = vector.broadcast %cst_50 : f32 to vector<8x128xf32>
    %82 = arith.cmpf ogt, %80, %81 : vector<8x128xf32>
    %cst_51 = arith.constant 0.000000e+00 : f32
    %83 = vector.broadcast %cst_51 : f32 to vector<8x128xf32>
    %84 = arith.minimumf %80, %83 : vector<8x128xf32>
    %85 = math.exp %84 : vector<8x128xf32>
    %cst_52 = arith.constant 1.000000e+00 : f32
    %86 = vector.broadcast %cst_52 : f32 to vector<8x128xf32>
    %87 = arith.subf %85, %86 : vector<8x128xf32>
    %cst_53 = arith.constant 1.67326319 : f32
    %88 = vector.broadcast %cst_53 : f32 to vector<8x128xf32>
    %89 = arith.mulf %88, %87 : vector<8x128xf32>
    %90 = arith.select %82, %80, %89 : vector<8x128xi1>, vector<8x128xf32>
    %cst_54 = arith.constant 1.05070102 : f32
    %91 = vector.broadcast %cst_54 : f32 to vector<8x128xf32>
    %92 = arith.mulf %91, %90 : vector<8x128xf32>
    %c6 = arith.constant 6 : index
    %c0_55 = arith.constant 0 : index
    %c0_56 = arith.constant 0 : index
    %93 = vector.load %arg2[%c6, %c0_55, %c0_56] : memref<7x128x128xf32, #tpu.memory_space<vmem>>, vector<1x128x128xf32>
    %94 = vector.shape_cast %93 : vector<1x128x128xf32> to vector<128x128xf32>
    %cst_57 = arith.constant dense<0.000000e+00> : vector<8x128xf32>
    %95 = tpu.matmul %92, %94, %cst_57 {dimension_numbers = #tpu.dot_dimension_numbers<[1], [0], [0], [1], [0, 0, 1, 1], [], []>} : vector<8x128xf32>, vector<128x128xf32>, vector<8x128xf32> -> vector<8x128xf32>
    %c5_58 = arith.constant 5 : index
    %c0_59 = arith.constant 0 : index
    %c0_60 = arith.constant 0 : index
    %96 = vector.load %arg3[%c5_58, %c0_59, %c0_60] : memref<6x1x128xf32, #tpu.memory_space<vmem>>, vector<1x1x128xf32>
    %97 = vector.shape_cast %96 : vector<1x1x128xf32> to vector<1x128xf32>
    %98 = vector.broadcast %97 : vector<1x128xf32> to vector<8x128xf32>
    %99 = arith.addf %95, %98 : vector<8x128xf32>
    %c0_61 = arith.constant 0 : index
    %c0_62 = arith.constant 0 : index
    %100 = vector.load %arg4[%c0_61, %c0_62] : memref<8x128xf32, #tpu.memory_space<vmem>>, vector<8x128xf32>
    tpu.vector_store %arg4[%c0_61, %c0_62], %99 {strides = array<i32>} : memref<8x128xf32, #tpu.memory_space<vmem>>, vector<8x128xf32>,
    return
  }
  func.func @transform_0(%arg0: i32) -> (i32, i32) {
    %c0_i32 = arith.constant 0 : i32
    %c0_i32_0 = arith.constant 0 : i32
    return %arg0, %c0_i32 : i32, i32
  }
  func.func @transform_1(%arg0: i32) -> (i32, i32, i32) {
    %c0_i32 = arith.constant 0 : i32
    %c0_i32_0 = arith.constant 0 : i32
    %c0_i32_1 = arith.constant 0 : i32
    %c0_i32_2 = arith.constant 0 : i32
    return %c0_i32, %c0_i32_0, %c0_i32_1 : i32, i32, i32
  }
  func.func @transform_2(%arg0: i32) -> (i32, i32, i32) {
    %c0_i32 = arith.constant 0 : i32
    %c0_i32_0 = arith.constant 0 : i32
    %c0_i32_1 = arith.constant 0 : i32
    %c0_i32_2 = arith.constant 0 : i32
    return %c0_i32, %c0_i32_0, %c0_i32_1 : i32, i32, i32
  }
  func.func @transform_3(%arg0: i32) -> (i32, i32) {
    %c0_i32 = arith.constant 0 : i32
    %c0_i32_0 = arith.constant 0 : i32
    return %arg0, %c0_i32 : i32, i32
  }
}

</mosaic_0001>

<llo_original>
// kernel: deepsets_apply.1
$region0: #{deepsets_apply.1}
  #allocation0 [shape = 'u32[]', space=smem, size = 0x4, offset = 0x4, fixed_abs, tag = 'smem constant byte address 0x4 - core index']
  #allocation1 [shape = 'u32[144,128]{1,0:T(1,128)}', space=vmem, size = 0x12000, scoped, tag = 'internal scratch']
  %s0 = inlined_call_operand.vmem [shape: f32[16,128], index: 0, kind: input, shape index: {}]
  %s1 = inlined_call_operand.hbm [shape: f32[7,128,128], index: 1, kind: input, shape index: {}]
  %s2 = inlined_call_operand.vmem [shape: f32[6,1,128], index: 2, kind: input, shape index: {}]
  %s3 = inlined_call_operand.vmem [shape: f32[16,128], index: 3, kind: output, shape index: {}]
  %s4 = sld [smem:[#allocation0]]
  $region49: #{deepsets_apply.1} parent=0
    _
  %s6 = ssub.s32 1, %s4
  %s7 = scalar_select 0, %s6, %s4
  $region1: #{deepsets_apply.1} parent=0
    #allocation2 [shape = 'u8[458752]{0}', space=vmem, size = 0x70000, scoped, tag = 'input window, operand 1, single buffered']
    #allocation3 [shape = 's32[2]{0}', space=sflag, size = 0x8, scoped, tag = 'scoped memory for deepsets_apply.1']
    %8 = vsyncpa [#allocation3], 0
    loop: start=0, step=1, limit=4
    $region2: #{deepsets_apply.1} parent=1 // loop_pre_header
      _
    $region3: #{deepsets_apply.1} parent=1 // loop_header
      %s10 = sphi 0, %s14
      %p11 = scmp.ge.s32.totalorder %s10, 4
      %s20 = sphi 0, %s22
      %s23 = sphi 0, %s20
      %s24 = sphi 0, %s23
      %s40 = sphi 0, %s24
      %s44 = sphi 0, %s44
      %s46 = sphi 0, %s44
      %s47 = sphi 0, %s46
      %s61 = sphi 0, %s47
      %s65 = sphi 0, %s65
      %s67 = sphi 0, %s65
      %s68 = sphi 0, %s67
      %s82 = sphi 0, %s68
      %s88 = sphi 0, %s90
      %s91 = sphi 0, %s88
      %s92 = sphi 0, %s91
      %s108 = sphi 0, %s92
    $region4: #{deepsets_apply.1} parent=1 // loop_header_branch
      %13 = sbr.rel (%p11) target = $region8
    $region5: #{deepsets_apply.1} parent=1 // loop_body
      %s15 = ssub.s32 %s10, 1
      %s16 = ssub.s32 %s10, 2
      %s17 = sadd.s32 %s10, 1
      %s18 = ssub.s32 %s10, %s17
      %p19 = scmp.eq.s32.totalorder %s18, 0
      %s21 = sadd.s32 %s20, 1
      %s22 = scalar_select %p19, %s20, %s21
      %p25 = pneg %p19
      %p26 = scmp.eq.s32.totalorder %s10, 1
      %p27 = por %p25, %p26
      %p28 = scmp.ne.s32.totalorder %s20, %s23
      %p29 = scmp.eq.s32.totalorder %s10, 0
      %p30 = por %p28, %p29
      %p31 = scmp.ne.s32.totalorder %s20, %s23
      %p32 = scmp.eq.s32.totalorder %s15, 1
      %p33 = por %p31, %p32
      %p34 = scmp.ne.s32.totalorder %s23, %s24
      %p35 = scmp.eq.s32.totalorder %s15, 0
      %p36 = por %p34, %p35
      %p37 = scmp.ne.s32.totalorder %s23, %s24
      %p38 = scmp.eq.s32.totalorder %s16, 1
      %p39 = por %p37, %p38
      %p41 = scmp.ne.s32.totalorder %s24, %s40
      %p42 = scmp.eq.s32.totalorder %s16, 0
      %p43 = por %p41, %p42
      %s45 = sadd.s32 %s44, 1
      %p48 = scmp.eq.s32.totalorder %s10, 1
      %p49 = scmp.ne.s32.totalorder %s44, %s46
      %p50 = scmp.eq.s32.totalorder %s10, 0
      %p51 = por %p49, %p50
      %p52 = scmp.ne.s32.totalorder %s44, %s46
      %p53 = scmp.eq.s32.totalorder %s15, 1
      %p54 = por %p52, %p53
      %p55 = scmp.ne.s32.totalorder %s46, %s47
      %p56 = scmp.eq.s32.totalorder %s15, 0
      %p57 = por %p55, %p56
      %p58 = scmp.ne.s32.totalorder %s46, %s47
      %p59 = scmp.eq.s32.totalorder %s16, 1
      %p60 = por %p58, %p59
      %p62 = scmp.ne.s32.totalorder %s47, %s61
      %p63 = scmp.eq.s32.totalorder %s16, 0
      %p64 = por %p62, %p63
      %s66 = sadd.s32 %s65, 1
      %p69 = scmp.eq.s32.totalorder %s10, 1
      %p70 = scmp.ne.s32.totalorder %s65, %s67
      %p71 = scmp.eq.s32.totalorder %s10, 0
      %p72 = por %p70, %p71
      %p73 = scmp.ne.s32.totalorder %s65, %s67
      %p74 = scmp.eq.s32.totalorder %s15, 1
      %p75 = por %p73, %p74
      %p76 = scmp.ne.s32.totalorder %s67, %s68
      %p77 = scmp.eq.s32.totalorder %s15, 0
      %p78 = por %p76, %p77
      %p79 = scmp.ne.s32.totalorder %s67, %s68
      %p80 = scmp.eq.s32.totalorder %s16, 1
      %p81 = por %p79, %p80
      %p83 = scmp.ne.s32.totalorder %s68, %s82
      %p84 = scmp.eq.s32.totalorder %s16, 0
      %p85 = por %p83, %p84
      %s86 = ssub.s32 %s10, %s17
      %p87 = scmp.eq.s32.totalorder %s86, 0
      %s89 = sadd.s32 %s88, 1
      %s90 = scalar_select %p87, %s88, %s89
      %p93 = pneg %p87
      %p94 = scmp.eq.s32.totalorder %s10, 1
      %p95 = por %p93, %p94
      %p96 = scmp.ne.s32.totalorder %s88, %s91
      %p97 = scmp.eq.s32.totalorder %s10, 0
      %p98 = por %p96, %p97
      %p99 = scmp.ne.s32.totalorder %s88, %s91
      %p100 = scmp.eq.s32.totalorder %s15, 1
      %p101 = por %p99, %p100
      %p102 = scmp.ne.s32.totalorder %s91, %s92
      %p103 = scmp.eq.s32.totalorder %s15, 0
      %p104 = por %p102, %p103
      %p105 = scmp.ne.s32.totalorder %s91, %s92
      %p106 = scmp.eq.s32.totalorder %s16, 1
      %p107 = por %p105, %p106
      %p109 = scmp.ne.s32.totalorder %s92, %s108
      %p110 = scmp.eq.s32.totalorder %s16, 0
      %p111 = por %p109, %p110
      %p112 = scmp.le.s32.totalorder 1, %s10
      %p113 = scmp.lt.s32.totalorder %s10, 3
      %p114 = pnand %p112, %p113
      %p115 = pneg %p114
      // Predicated region
      $region9: #{deepsets_apply.1} parent=5 // pred_check
        _
      $region10: #{deepsets_apply.1} parent=5 // pred_check_branch
        %117 = sbr.rel (%p114) target = $region12
      $region11: #{deepsets_apply.1} parent=5 // pred_region
        %s118 = ssub.s32 %s10, 1
        // Predicated region
        $region13: #{deepsets_apply.1} parent=11 // pred_check
          %p119 = pneg %p57
        $region14: #{deepsets_apply.1} parent=11 // pred_check_branch
          %121 = sbr.rel (%p119) target = $region16
        $region15: #{deepsets_apply.1} parent=11 // pred_region
          %s123 = ssub.s32 14336, 14336
          %124 = vsyncadd [#allocation3], %s123
          %s125 = sshll.u32 [#allocation2], 4
          %s126 = int_to_ptr.vmem [resolvable:$true] %s125
          %131 = dma.hbm_to_vmem [thread:$0]  %s1, 14336, %s126, [#allocation3], 128, 128, 8
        $region16: #{deepsets_apply.1} parent=11 // pred_fallthru
          _
        // Predicated region
        $region17: #{deepsets_apply.1} parent=11 // pred_check
          %p132 = pneg %p78
        $region18: #{deepsets_apply.1} parent=11 // pred_check_branch
          %134 = sbr.rel (%p132) target = $region20
        $region19: #{deepsets_apply.1} parent=11 // pred_region
          _
        $region20: #{deepsets_apply.1} parent=11 // pred_fallthru
          _
      $region12: #{deepsets_apply.1} parent=5 // pred_fallthru
        _
      %p135 = scmp.lt.s32.totalorder %s10, 2
      // Predicated region
      $region21: #{deepsets_apply.1} parent=5 // pred_check
        %p136 = pneg %p135
      $region22: #{deepsets_apply.1} parent=5 // pred_check_branch
        %138 = sbr.rel (%p136) target = $region24
      $region23: #{deepsets_apply.1} parent=5 // pred_region
        // Predicated region
        $region25: #{deepsets_apply.1} parent=23 // pred_check
          %p139 = pneg %p30
        $region26: #{deepsets_apply.1} parent=23 // pred_check_branch
          %141 = sbr.rel (%p139) target = $region28
        $region27: #{deepsets_apply.1} parent=23 // pred_region
          %p142 = scmp.lt.s32.totalorder %s10, 1
          %s143 = scalar_select %p142, %s10, 1
          %s144 = smul.addr %s143, 8
          %s145 = scalar_lea.vmem %s0, %s144
        $region28: #{deepsets_apply.1} parent=23 // pred_fallthru
          _
      $region24: #{deepsets_apply.1} parent=5 // pred_fallthru
        _
      %p146 = scmp.le.s32.totalorder 1, %s10
      %p147 = scmp.lt.s32.totalorder %s10, 3
      %p148 = pnand %p146, %p147
      %p149 = pneg %p148
      // Predicated region
      $region29: #{deepsets_apply.1} parent=5 // pred_check
        _
      $region30: #{deepsets_apply.1} parent=5 // pred_check_branch
        %151 = sbr.rel (%p148) target = $region32
      $region31: #{deepsets_apply.1} parent=5 // pred_region
        %s152 = ssub.s32 %s10, 1
        // Predicated region
        $region33: #{deepsets_apply.1} parent=31 // pred_check
          %p153 = pneg %p57
        $region34: #{deepsets_apply.1} parent=31 // pred_check_branch
          %155 = sbr.rel (%p153) target = $region36
        $region35: #{deepsets_apply.1} parent=31 // pred_region
          %156 = dma.done [#allocation3], 14336
        $region36: #{deepsets_apply.1} parent=31 // pred_fallthru
          _
        %p157 = scmp.lt.s32.totalorder %s15, 1
        %s158 = scalar_select %p157, %s15, 1
        %s159 = smul.addr %s158, 8
        %s160 = scalar_lea.vmem %s0, %s159
        %p161 = pneg %p36
        %p162 = pneg %p33
        %p163 = pneg %p57
        %p164 = pneg %p54
        %p165 = pneg %p78
        %p166 = pneg %p75
        %p167 = pneg %p104
        %p168 = pneg %p101
        %p169 = scmp.lt.s32.totalorder %s15, 1
        %s170 = scalar_select %p169, %s15, 1
        %s171 = smul.addr %s170, 8
        %s172 = scalar_lea.vmem %s3, %s171
        %p173 = scmp.lt.s32.totalorder %s15, 1
        %s174 = scalar_select %p173, %s15, 1
        %s175 = smul.addr %s174, 8
        %s176 = scalar_lea.vmem %s0, %s175
        %p177 = scmp.lt.s32.totalorder %s15, 1
        %s178 = scalar_select %p177, %s15, 1
        %s179 = smul.addr %s178, 8
        %s180 = scalar_lea.vmem %s3, %s179
        %v181 = vld [vmem:[%s176] sm:$0xff]
        %v182 = vld [vmem:[#allocation2] sm:$0xff]
        %v183 = vld [vmem:[#allocation2 + $0x8] sm:$0xff]
        %v184 = vld [vmem:[#allocation2 + $0x10] sm:$0xff]
        %v185 = vld [vmem:[#allocation2 + $0x18] sm:$0xff]
        %v186 = vld [vmem:[#allocation2 + $0x20] sm:$0xff]
        %v187 = vld [vmem:[#allocation2 + $0x28] sm:$0xff]
        %v188 = vld [vmem:[#allocation2 + $0x30] sm:$0xff]
        %v189 = vld [vmem:[#allocation2 + $0x38] sm:$0xff]
        %v190 = vld [vmem:[#allocation2 + $0x40] sm:$0xff]
        %v191 = vld [vmem:[#allocation2 + $0x48] sm:$0xff]
        %v192 = vld [vmem:[#allocation2 + $0x50] sm:$0xff]
        %v193 = vld [vmem:[#allocation2 + $0x58] sm:$0xff]
        %v194 = vld [vmem:[#allocation2 + $0x60] sm:$0xff]
        %v195 = vld [vmem:[#allocation2 + $0x68] sm:$0xff]
        %v196 = vld [vmem:[#allocation2 + $0x70] sm:$0xff]
        %v197 = vld [vmem:[#allocation2 + $0x78] sm:$0xff]
        %v198 = vld [vmem:[%s2] sm:$0x1]
        %v200 = vlaneseq
        %v201 = vshrl.u32 %v200, 7
        %v202 = vsub.s32 0, %v201
        %v203 = vrot.slane %v198, %v202
        %205 = vmatprep.subr.mxu0 0.0
        %206 = vmatpush1.msra.mxu0 %v197
        %207 = vmatprep.subr.mxu0 0.0
        %208 = vmatpush1.msra.mxu0 %v196
        %209 = vmatprep.subr.mxu0 0.0
        %210 = vmatpush1.msra.mxu0 %v195
        %211 = vmatprep.subr.mxu0 0.0
        %212 = vmatpush1.msra.mxu0 %v194
        %213 = vmatprep.subr.mxu0 0.0
        %214 = vmatpush1.msra.mxu0 %v193
        %215 = vmatprep.subr.mxu0 0.0
        %216 = vmatpush1.msra.mxu0 %v192
        %217 = vmatprep.subr.mxu0 0.0
        %218 = vmatpush1.msra.mxu0 %v191
        %219 = vmatprep.subr.mxu0 0.0
        %220 = vmatpush1.msra.mxu0 %v190
        %221 = vmatprep.subr.mxu0 0.0
        %222 = vmatpush1.msra.mxu0 %v189
        %223 = vmatprep.subr.mxu0 0.0
        %224 = vmatpush1.msra.mxu0 %v188
        %225 = vmatprep.subr.mxu0 0.0
        %226 = vmatpush1.msra.mxu0 %v187
        %227 = vmatprep.subr.mxu0 0.0
        %228 = vmatpush1.msra.mxu0 %v186
        %229 = vmatprep.subr.mxu0 0.0
        %230 = vmatpush1.msra.mxu0 %v185
        %231 = vmatprep.subr.mxu0 0.0
        %232 = vmatpush1.msra.mxu0 %v184
        %233 = vmatprep.subr.mxu0 0.0
        %234 = vmatpush1.msra.mxu0 %v183
        %235 = vmatprep.subr.mxu0 0.0
        %236 = vmatpush1.msra.mxu0 %v182
        %237 = vmatprep.subr.mxu0 0.0
        %238 = vmatpush2.msra.mxu0 0.0
        %239 = vmatprep.subr.mxu0 0.0
        %240 = vmatpush2.msra.mxu0 0.0
        %241 = vmatprep.subr.mxu0 0.0
        %242 = vmatpush2.msra.mxu0 0.0
        %243 = vmatprep.subr.mxu0 0.0
        %244 = vmatpush2.msra.mxu0 0.0
        %245 = vmatprep.subr.mxu0 0.0
        %246 = vmatpush2.msra.mxu0 0.0
        %247 = vmatprep.subr.mxu0 0.0
        %248 = vmatpush2.msra.mxu0 0.0
        %249 = vmatprep.subr.mxu0 0.0
        %250 = vmatpush2.msra.mxu0 0.0
        %251 = vmatprep.subr.mxu0 0.0
        %252 = vmatpush2.msra.mxu0 0.0
        %253 = vmatprep.subr.mxu0 0.0
        %254 = vmatpush2.msra.mxu0 0.0
        %255 = vmatprep.subr.mxu0 0.0
        %256 = vmatpush2.msra.mxu0 0.0
        %257 = vmatprep.subr.mxu0 0.0
        %258 = vmatpush2.msra.mxu0 0.0
        %259 = vmatprep.subr.mxu0 0.0
        %260 = vmatpush2.msra.mxu0 0.0
        %261 = vmatprep.subr.mxu0 0.0
        %262 = vmatpush2.msra.mxu0 0.0
        %263 = vmatprep.subr.mxu0 0.0
        %264 = vmatpush2.msra.mxu0 0.0
        %265 = vmatprep.subr.mxu0 0.0
        %266 = vmatpush2.msra.mxu0 0.0
        %267 = vmatprep.subr.mxu0 0.0
        %268 = vmatpush2.msra.mxu0 0.0
        %269 = vmatprep.mubr.f32.mxu0 0.0
        %270 = vmatmul.mubr.f32.gmra.mxu0 %v181
        %v271 = vpop.f32.mrf.mxu0
        %v272 = vadd.f32 %v203, %v271
        %v273 = vpop.f32.mrf.mxu0
        %274 = vdwg.mxu0
        %vm275 = vcmp.gt.f32.partialorder %v272, 0.0
        %v276 = vmin.f32 %v272, 0.0
        %v277 = vmul.f32 %v276, 1.442695
        %v278 = vpow.pop %v277
        %v279 = vsub.f32 %v278, 1.0
        %v280 = vmul.f32 %v279, 1.6732632
        %v281 = vsel %vm275, %v272, %v280
        %v282 = vmul.f32 %v281, 1.050701
        %s283 = scalar_lea.vmem [#allocation2], 128
        %v284 = vld [vmem:[%s283] sm:$0xff]
        %v285 = vld [vmem:[%s283 + $0x8] sm:$0xff]
        %v286 = vld [vmem:[%s283 + $0x10] sm:$0xff]
        %v287 = vld [vmem:[%s283 + $0x18] sm:$0xff]
        %v288 = vld [vmem:[%s283 + $0x20] sm:$0xff]
        %v289 = vld [vmem:[%s283 + $0x28] sm:$0xff]
        %v290 = vld [vmem:[%s283 + $0x30] sm:$0xff]
        %v291 = vld [vmem:[%s283 + $0x38] sm:$0xff]
        %v292 = vld [vmem:[%s283 + $0x40] sm:$0xff]
        %v293 = vld [vmem:[%s283 + $0x48] sm:$0xff]
        %v294 = vld [vmem:[%s283 + $0x50] sm:$0xff]
        %v295 = vld [vmem:[%s283 + $0x58] sm:$0xff]
        %v296 = vld [vmem:[%s283 + $0x60] sm:$0xff]
        %v297 = vld [vmem:[%s283 + $0x68] sm:$0xff]
        %v298 = vld [vmem:[%s283 + $0x70] sm:$0xff]
        %v299 = vld [vmem:[%s283 + $0x78] sm:$0xff]
        %s300 = scalar_lea.vmem %s2, 1
        %v301 = vld [vmem:[%s300] sm:$0x1]
        %v303 = vlaneseq
        %v304 = vshrl.u32 %v303, 7
        %v305 = vsub.s32 0, %v304
        %v306 = vrot.slane %v301, %v305
        %308 = vmatprep.subr.mxu0 0.0
        %309 = vmatpush1.msra.mxu0 %v299
        %310 = vmatprep.subr.mxu0 0.0
        %311 = vmatpush1.msra.mxu0 %v298
        %312 = vmatprep.subr.mxu0 0.0
        %313 = vmatpush1.msra.mxu0 %v297
        %314 = vmatprep.subr.mxu0 0.0
        %315 = vmatpush1.msra.mxu0 %v296
        %316 = vmatprep.subr.mxu0 0.0
        %317 = vmatpush1.msra.mxu0 %v295
        %318 = vmatprep.subr.mxu0 0.0
        %319 = vmatpush1.msra.mxu0 %v294
        %320 = vmatprep.subr.mxu0 0.0
        %321 = vmatpush1.msra.mxu0 %v293
        %322 = vmatprep.subr.mxu0 0.0
        %323 = vmatpush1.msra.mxu0 %v292
        %324 = vmatprep.subr.mxu0 0.0
        %325 = vmatpush1.msra.mxu0 %v291
        %326 = vmatprep.subr.mxu0 0.0
        %327 = vmatpush1.msra.mxu0 %v290
        %328 = vmatprep.subr.mxu0 0.0
        %329 = vmatpush1.msra.mxu0 %v289
        %330 = vmatprep.subr.mxu0 0.0
        %331 = vmatpush1.msra.mxu0 %v288
        %332 = vmatprep.subr.mxu0 0.0
        %333 = vmatpush1.msra.mxu0 %v287
        %334 = vmatprep.subr.mxu0 0.0
        %335 = vmatpush1.msra.mxu0 %v286
        %336 = vmatprep.subr.mxu0 0.0
        %337 = vmatpush1.msra.mxu0 %v285
        %338 = vmatprep.subr.mxu0 0.0
        %339 = vmatpush1.msra.mxu0 %v284
        %340 = vmatprep.subr.mxu0 0.0
        %341 = vmatpush2.msra.mxu0 0.0
        %342 = vmatprep.subr.mxu0 0.0
        %343 = vmatpush2.msra.mxu0 0.0
        %344 = vmatprep.subr.mxu0 0.0
        %345 = vmatpush2.msra.mxu0 0.0
        %346 = vmatprep.subr.mxu0 0.0
        %347 = vmatpush2.msra.mxu0 0.0
        %348 = vmatprep.subr.mxu0 0.0
        %349 = vmatpush2.msra.mxu0 0.0
        %350 = vmatprep.subr.mxu0 0.0
        %351 = vmatpush2.msra.mxu0 0.0
        %352 = vmatprep.subr.mxu0 0.0
        %353 = vmatpush2.msra.mxu0 0.0
        %354 = vmatprep.subr.mxu0 0.0
        %355 = vmatpush2.msra.mxu0 0.0
        %356 = vmatprep.subr.mxu0 0.0
        %357 = vmatpush2.msra.mxu0 0.0
        %358 = vmatprep.subr.mxu0 0.0
        %359 = vmatpush2.msra.mxu0 0.0
        %360 = vmatprep.subr.mxu0 0.0
        %361 = vmatpush2.msra.mxu0 0.0
        %362 = vmatprep.subr.mxu0 0.0
        %363 = vmatpush2.msra.mxu0 0.0
        %364 = vmatprep.subr.mxu0 0.0
        %365 = vmatpush2.msra.mxu0 0.0
        %366 = vmatprep.subr.mxu0 0.0
        %367 = vmatpush2.msra.mxu0 0.0
        %368 = vmatprep.subr.mxu0 0.0
        %369 = vmatpush2.msra.mxu0 0.0
        %370 = vmatprep.subr.mxu0 0.0
        %371 = vmatpush2.msra.mxu0 0.0
        %372 = vmatprep.mubr.f32.mxu0 0.0
        %373 = vmatmul.mubr.f32.gmra.mxu0 %v282
        %v374 = vpop.f32.mrf.mxu0
        %v375 = vadd.f32 %v306, %v374
        %v376 = vpop.f32.mrf.mxu0
        %377 = vdwg.mxu0
        %vm378 = vcmp.gt.f32.partialorder %v375, 0.0
        %v379 = vmin.f32 %v375, 0.0
        %v380 = vmul.f32 %v379, 1.442695
        %v381 = vpow.pop %v380
        %v382 = vsub.f32 %v381, 1.0
        %v383 = vmul.f32 %v382, 1.6732632
        %v384 = vsel %vm378, %v375, %v383
        %v385 = vmul.f32 %v384, 1.050701
        %s386 = scalar_lea.vmem [#allocation2], 256
        %v387 = vld [vmem:[%s386] sm:$0xff]
        %v388 = vld [vmem:[%s386 + $0x8] sm:$0xff]
        %v389 = vld [vmem:[%s386 + $0x10] sm:$0xff]
        %v390 = vld [vmem:[%s386 + $0x18] sm:$0xff]
        %v391 = vld [vmem:[%s386 + $0x20] sm:$0xff]
        %v392 = vld [vmem:[%s386 + $0x28] sm:$0xff]
        %v393 = vld [vmem:[%s386 + $0x30] sm:$0xff]
        %v394 = vld [vmem:[%s386 + $0x38] sm:$0xff]
        %v395 = vld [vmem:[%s386 + $0x40] sm:$0xff]
        %v396 = vld [vmem:[%s386 + $0x48] sm:$0xff]
        %v397 = vld [vmem:[%s386 + $0x50] sm:$0xff]
        %v398 = vld [vmem:[%s386 + $0x58] sm:$0xff]
        %v399 = vld [vmem:[%s386 + $0x60] sm:$0xff]
        %v400 = vld [vmem:[%s386 + $0x68] sm:$0xff]
        %v401 = vld [vmem:[%s386 + $0x70] sm:$0xff]
        %v402 = vld [vmem:[%s386 + $0x78] sm:$0xff]
        %s403 = scalar_lea.vmem %s2, 2
        %v404 = vld [vmem:[%s403] sm:$0x1]
        %v406 = vlaneseq
        %v407 = vshrl.u32 %v406, 7
        %v408 = vsub.s32 0, %v407
        %v409 = vrot.slane %v404, %v408
        %411 = vmatprep.subr.mxu0 0.0
        %412 = vmatpush1.msra.mxu0 %v402
        %413 = vmatprep.subr.mxu0 0.0
        %414 = vmatpush1.msra.mxu0 %v401
        %415 = vmatprep.subr.mxu0 0.0
        %416 = vmatpush1.msra.mxu0 %v400
        %417 = vmatprep.subr.mxu0 0.0
        %418 = vmatpush1.msra.mxu0 %v399
        %419 = vmatprep.subr.mxu0 0.0
        %420 = vmatpush1.msra.mxu0 %v398
        %421 = vmatprep.subr.mxu0 0.0
        %422 = vmatpush1.msra.mxu0 %v397
        %423 = vmatprep.subr.mxu0 0.0
        %424 = vmatpush1.msra.mxu0 %v396
        %425 = vmatprep.subr.mxu0 0.0
        %426 = vmatpush1.msra.mxu0 %v395
        %427 = vmatprep.subr.mxu0 0.0
        %428 = vmatpush1.msra.mxu0 %v394
        %429 = vmatprep.subr.mxu0 0.0
        %430 = vmatpush1.msra.mxu0 %v393
        %431 = vmatprep.subr.mxu0 0.0
        %432 = vmatpush1.msra.mxu0 %v392
        %433 = vmatprep.subr.mxu0 0.0
        %434 = vmatpush1.msra.mxu0 %v391
        %435 = vmatprep.subr.mxu0 0.0
        %436 = vmatpush1.msra.mxu0 %v390
        %437 = vmatprep.subr.mxu0 0.0
        %438 = vmatpush1.msra.mxu0 %v389
        %439 = vmatprep.subr.mxu0 0.0
        %440 = vmatpush1.msra.mxu0 %v388
        %441 = vmatprep.subr.mxu0 0.0
        %442 = vmatpush1.msra.mxu0 %v387
        %443 = vmatprep.subr.mxu0 0.0
        %444 = vmatpush2.msra.mxu0 0.0
        %445 = vmatprep.subr.mxu0 0.0
        %446 = vmatpush2.msra.mxu0 0.0
        %447 = vmatprep.subr.mxu0 0.0
        %448 = vmatpush2.msra.mxu0 0.0
        %449 = vmatprep.subr.mxu0 0.0
        %450 = vmatpush2.msra.mxu0 0.0
        %451 = vmatprep.subr.mxu0 0.0
        %452 = vmatpush2.msra.mxu0 0.0
        %453 = vmatprep.subr.mxu0 0.0
        %454 = vmatpush2.msra.mxu0 0.0
        %455 = vmatprep.subr.mxu0 0.0
        %456 = vmatpush2.msra.mxu0 0.0
        %457 = vmatprep.subr.mxu0 0.0
        %458 = vmatpush2.msra.mxu0 0.0
        %459 = vmatprep.subr.mxu0 0.0
        %460 = vmatpush2.msra.mxu0 0.0
        %461 = vmatprep.subr.mxu0 0.0
        %462 = vmatpush2.msra.mxu0 0.0
        %463 = vmatprep.subr.mxu0 0.0
        %464 = vmatpush2.msra.mxu0 0.0
        %465 = vmatprep.subr.mxu0 0.0
        %466 = vmatpush2.msra.mxu0 0.0
        %467 = vmatprep.subr.mxu0 0.0
        %468 = vmatpush2.msra.mxu0 0.0
        %469 = vmatprep.subr.mxu0 0.0
        %470 = vmatpush2.msra.mxu0 0.0
        %471 = vmatprep.subr.mxu0 0.0
        %472 = vmatpush2.msra.mxu0 0.0
        %473 = vmatprep.subr.mxu0 0.0
        %474 = vmatpush2.msra.mxu0 0.0
        %475 = vmatprep.mubr.f32.mxu0 0.0
        %476 = vmatmul.mubr.f32.gmra.mxu0 %v385
        %v477 = vpop.f32.mrf.mxu0
        %v478 = vadd.f32 %v409, %v477
        %v479 = vpop.f32.mrf.mxu0
        %480 = vdwg.mxu0
        %v481 = vrot.slane %v478, 4
        %v482 = vadd.f32 %v478, %v481
        %v483 = vrot.slane %v482, 2
        %v484 = vadd.f32 %v482, %v483
        %v485 = vrot.slane %v484, 1
        %v486 = vadd.f32 %v484, %v485
        %s487 = scalar_lea.vmem [#allocation2], 512
        %v488 = vld [vmem:[%s487] sm:$0xff]
        %v489 = vld [vmem:[%s487 + $0x8] sm:$0xff]
        %v490 = vld [vmem:[%s487 + $0x10] sm:$0xff]
        %v491 = vld [vmem:[%s487 + $0x18] sm:$0xff]
        %v492 = vld [vmem:[%s487 + $0x20] sm:$0xff]
        %v493 = vld [vmem:[%s487 + $0x28] sm:$0xff]
        %v494 = vld [vmem:[%s487 + $0x30] sm:$0xff]
        %v495 = vld [vmem:[%s487 + $0x38] sm:$0xff]
        %v496 = vld [vmem:[%s487 + $0x40] sm:$0xff]
        %v497 = vld [vmem:[%s487 + $0x48] sm:$0xff]
        %v498 = vld [vmem:[%s487 + $0x50] sm:$0xff]
        %v499 = vld [vmem:[%s487 + $0x58] sm:$0xff]
        %v500 = vld [vmem:[%s487 + $0x60] sm:$0xff]
        %v501 = vld [vmem:[%s487 + $0x68] sm:$0xff]
        %v502 = vld [vmem:[%s487 + $0x70] sm:$0xff]
        %v503 = vld [vmem:[%s487 + $0x78] sm:$0xff]
        %s504 = scalar_lea.vmem %s2, 3
        %v505 = vld [vmem:[%s504] sm:$0x1]
        %506 = vmatprep.subr.mxu0 0.0
        %507 = vmatpush1.msra.mxu0 %v503
        %508 = vmatprep.subr.mxu0 0.0
        %509 = vmatpush1.msra.mxu0 %v502
        %510 = vmatprep.subr.mxu0 0.0
        %511 = vmatpush1.msra.mxu0 %v501
        %512 = vmatprep.subr.mxu0 0.0
        %513 = vmatpush1.msra.mxu0 %v500
        %514 = vmatprep.subr.mxu0 0.0
        %515 = vmatpush1.msra.mxu0 %v499
        %516 = vmatprep.subr.mxu0 0.0
        %517 = vmatpush1.msra.mxu0 %v498
        %518 = vmatprep.subr.mxu0 0.0
        %519 = vmatpush1.msra.mxu0 %v497
        %520 = vmatprep.subr.mxu0 0.0
        %521 = vmatpush1.msra.mxu0 %v496
        %522 = vmatprep.subr.mxu0 0.0
        %523 = vmatpush1.msra.mxu0 %v495
        %524 = vmatprep.subr.mxu0 0.0
        %525 = vmatpush1.msra.mxu0 %v494
        %526 = vmatprep.subr.mxu0 0.0
        %527 = vmatpush1.msra.mxu0 %v493
        %528 = vmatprep.subr.mxu0 0.0
        %529 = vmatpush1.msra.mxu0 %v492
        %530 = vmatprep.subr.mxu0 0.0
        %531 = vmatpush1.msra.mxu0 %v491
        %532 = vmatprep.subr.mxu0 0.0
        %533 = vmatpush1.msra.mxu0 %v490
        %534 = vmatprep.subr.mxu0 0.0
        %535 = vmatpush1.msra.mxu0 %v489
        %536 = vmatprep.subr.mxu0 0.0
        %537 = vmatpush1.msra.mxu0 %v488
        %538 = vmatprep.subr.mxu0 0.0
        %539 = vmatpush2.msra.mxu0 0.0
        %540 = vmatprep.subr.mxu0 0.0
        %541 = vmatpush2.msra.mxu0 0.0
        %542 = vmatprep.subr.mxu0 0.0
        %543 = vmatpush2.msra.mxu0 0.0
        %544 = vmatprep.subr.mxu0 0.0
        %545 = vmatpush2.msra.mxu0 0.0
        %546 = vmatprep.subr.mxu0 0.0
        %547 = vmatpush2.msra.mxu0 0.0
        %548 = vmatprep.subr.mxu0 0.0
        %549 = vmatpush2.msra.mxu0 0.0
        %550 = vmatprep.subr.mxu0 0.0
        %551 = vmatpush2.msra.mxu0 0.0
        %552 = vmatprep.subr.mxu0 0.0
        %553 = vmatpush2.msra.mxu0 0.0
        %554 = vmatprep.subr.mxu0 0.0
        %555 = vmatpush2.msra.mxu0 0.0
        %556 = vmatprep.subr.mxu0 0.0
        %557 = vmatpush2.msra.mxu0 0.0
        %558 = vmatprep.subr.mxu0 0.0
        %559 = vmatpush2.msra.mxu0 0.0
        %560 = vmatprep.subr.mxu0 0.0
        %561 = vmatpush2.msra.mxu0 0.0
        %562 = vmatprep.subr.mxu0 0.0
        %563 = vmatpush2.msra.mxu0 0.0
        %564 = vmatprep.subr.mxu0 0.0
        %565 = vmatpush2.msra.mxu0 0.0
        %566 = vmatprep.subr.mxu0 0.0
        %567 = vmatpush2.msra.mxu0 0.0
        %568 = vmatprep.subr.mxu0 0.0
        %569 = vmatpush2.msra.mxu0 0.0
        %570 = vmatprep.mubr.f32.mxu0 0.0
        %571 = vmatmul.mubr.f32.gmra.mxu0 %v486
        %v572 = vpop.f32.mrf.mxu0
        %v573 = vadd.f32 %v505, %v572
        %v574 = vpop.f32.mrf.mxu0
        %575 = vdwg.mxu0
        %v576 = vlaneseq
        %v577 = vshrl.u32 %v576, 7
        %v578 = vsub.s32 0, %v577
        %v579 = vrot.slane %v573, %v578
        %s580 = scalar_lea.vmem [#allocation2], 384
        %v581 = vld [vmem:[%s580] sm:$0xff]
        %v582 = vld [vmem:[%s580 + $0x8] sm:$0xff]
        %v583 = vld [vmem:[%s580 + $0x10] sm:$0xff]
        %v584 = vld [vmem:[%s580 + $0x18] sm:$0xff]
        %v585 = vld [vmem:[%s580 + $0x20] sm:$0xff]
        %v586 = vld [vmem:[%s580 + $0x28] sm:$0xff]
        %v587 = vld [vmem:[%s580 + $0x30] sm:$0xff]
        %v588 = vld [vmem:[%s580 + $0x38] sm:$0xff]
        %v589 = vld [vmem:[%s580 + $0x40] sm:$0xff]
        %v590 = vld [vmem:[%s580 + $0x48] sm:$0xff]
        %v591 = vld [vmem:[%s580 + $0x50] sm:$0xff]
        %v592 = vld [vmem:[%s580 + $0x58] sm:$0xff]
        %v593 = vld [vmem:[%s580 + $0x60] sm:$0xff]
        %v594 = vld [vmem:[%s580 + $0x68] sm:$0xff]
        %v595 = vld [vmem:[%s580 + $0x70] sm:$0xff]
        %v596 = vld [vmem:[%s580 + $0x78] sm:$0xff]
        %597 = vmatprep.subr.mxu0 0.0
        %598 = vmatpush1.msra.mxu0 %v596
        %599 = vmatprep.subr.mxu0 0.0
        %600 = vmatpush1.msra.mxu0 %v595
        %601 = vmatprep.subr.mxu0 0.0
        %602 = vmatpush1.msra.mxu0 %v594
        %603 = vmatprep.subr.mxu0 0.0
        %604 = vmatpush1.msra.mxu0 %v593
        %605 = vmatprep.subr.mxu0 0.0
        %606 = vmatpush1.msra.mxu0 %v592
        %607 = vmatprep.subr.mxu0 0.0
        %608 = vmatpush1.msra.mxu0 %v591
        %609 = vmatprep.subr.mxu0 0.0
        %610 = vmatpush1.msra.mxu0 %v590
        %611 = vmatprep.subr.mxu0 0.0
        %612 = vmatpush1.msra.mxu0 %v589
        %613 = vmatprep.subr.mxu0 0.0
        %614 = vmatpush1.msra.mxu0 %v588
        %615 = vmatprep.subr.mxu0 0.0
        %616 = vmatpush1.msra.mxu0 %v587
        %617 = vmatprep.subr.mxu0 0.0
        %618 = vmatpush1.msra.mxu0 %v586
        %619 = vmatprep.subr.mxu0 0.0
        %620 = vmatpush1.msra.mxu0 %v585
        %621 = vmatprep.subr.mxu0 0.0
        %622 = vmatpush1.msra.mxu0 %v584
        %623 = vmatprep.subr.mxu0 0.0
        %624 = vmatpush1.msra.mxu0 %v583
        %625 = vmatprep.subr.mxu0 0.0
        %626 = vmatpush1.msra.mxu0 %v582
        %627 = vmatprep.subr.mxu0 0.0
        %628 = vmatpush1.msra.mxu0 %v581
        %629 = vmatprep.subr.mxu0 0.0
        %630 = vmatpush2.msra.mxu0 0.0
        %631 = vmatprep.subr.mxu0 0.0
        %632 = vmatpush2.msra.mxu0 0.0
        %633 = vmatprep.subr.mxu0 0.0
        %634 = vmatpush2.msra.mxu0 0.0
        %635 = vmatprep.subr.mxu0 0.0
        %636 = vmatpush2.msra.mxu0 0.0
        %637 = vmatprep.subr.mxu0 0.0
        %638 = vmatpush2.msra.mxu0 0.0
        %639 = vmatprep.subr.mxu0 0.0
        %640 = vmatpush2.msra.mxu0 0.0
        %641 = vmatprep.subr.mxu0 0.0
        %642 = vmatpush2.msra.mxu0 0.0
        %643 = vmatprep.subr.mxu0 0.0
        %644 = vmatpush2.msra.mxu0 0.0
        %645 = vmatprep.subr.mxu0 0.0
        %646 = vmatpush2.msra.mxu0 0.0
        %647 = vmatprep.subr.mxu0 0.0
        %648 = vmatpush2.msra.mxu0 0.0
        %649 = vmatprep.subr.mxu0 0.0
        %650 = vmatpush2.msra.mxu0 0.0
        %651 = vmatprep.subr.mxu0 0.0
        %652 = vmatpush2.msra.mxu0 0.0
        %653 = vmatprep.subr.mxu0 0.0
        %654 = vmatpush2.msra.mxu0 0.0
        %655 = vmatprep.subr.mxu0 0.0
        %656 = vmatpush2.msra.mxu0 0.0
        %657 = vmatprep.subr.mxu0 0.0
        %658 = vmatpush2.msra.mxu0 0.0
        %659 = vmatprep.subr.mxu0 0.0
        %660 = vmatpush2.msra.mxu0 0.0
        %661 = vmatprep.mubr.f32.mxu0 0.0
        %662 = vmatmul.mubr.f32.gmra.mxu0 %v478
        %v663 = vpop.f32.mrf.mxu0
        %v664 = vadd.f32 %v579, %v663
        %v665 = vpop.f32.mrf.mxu0
        %666 = vdwg.mxu0
        %vm667 = vcmp.gt.f32.partialorder %v664, 0.0
        %v668 = vmin.f32 %v664, 0.0
        %v669 = vmul.f32 %v668, 1.442695
        %v670 = vpow.pop %v669
        %v671 = vsub.f32 %v670, 1.0
        %v672 = vmul.f32 %v671, 1.6732632
        %v673 = vsel %vm667, %v664, %v672
        %v674 = vmul.f32 %v673, 1.050701
        %s675 = scalar_lea.vmem [#allocation2], 640
        %v676 = vld [vmem:[%s675] sm:$0xff]
        %v677 = vld [vmem:[%s675 + $0x8] sm:$0xff]
        %v678 = vld [vmem:[%s675 + $0x10] sm:$0xff]
        %v679 = vld [vmem:[%s675 + $0x18] sm:$0xff]
        %v680 = vld [vmem:[%s675 + $0x20] sm:$0xff]
        %v681 = vld [vmem:[%s675 + $0x28] sm:$0xff]
        %v682 = vld [vmem:[%s675 + $0x30] sm:$0xff]
        %v683 = vld [vmem:[%s675 + $0x38] sm:$0xff]
        %v684 = vld [vmem:[%s675 + $0x40] sm:$0xff]
        %v685 = vld [vmem:[%s675 + $0x48] sm:$0xff]
        %v686 = vld [vmem:[%s675 + $0x50] sm:$0xff]
        %v687 = vld [vmem:[%s675 + $0x58] sm:$0xff]
        %v688 = vld [vmem:[%s675 + $0x60] sm:$0xff]
        %v689 = vld [vmem:[%s675 + $0x68] sm:$0xff]
        %v690 = vld [vmem:[%s675 + $0x70] sm:$0xff]
        %v691 = vld [vmem:[%s675 + $0x78] sm:$0xff]
        %s692 = scalar_lea.vmem %s2, 4
        %v693 = vld [vmem:[%s692] sm:$0x1]
        %v695 = vlaneseq
        %v696 = vshrl.u32 %v695, 7
        %v697 = vsub.s32 0, %v696
        %v698 = vrot.slane %v693, %v697
        %700 = vmatprep.subr.mxu0 0.0
        %701 = vmatpush1.msra.mxu0 %v691
        %702 = vmatprep.subr.mxu0 0.0
        %703 = vmatpush1.msra.mxu0 %v690
        %704 = vmatprep.subr.mxu0 0.0
        %705 = vmatpush1.msra.mxu0 %v689
        %706 = vmatprep.subr.mxu0 0.0
        %707 = vmatpush1.msra.mxu0 %v688
        %708 = vmatprep.subr.mxu0 0.0
        %709 = vmatpush1.msra.mxu0 %v687
        %710 = vmatprep.subr.mxu0 0.0
        %711 = vmatpush1.msra.mxu0 %v686
        %712 = vmatprep.subr.mxu0 0.0
        %713 = vmatpush1.msra.mxu0 %v685
        %714 = vmatprep.subr.mxu0 0.0
        %715 = vmatpush1.msra.mxu0 %v684
        %716 = vmatprep.subr.mxu0 0.0
        %717 = vmatpush1.msra.mxu0 %v683
        %718 = vmatprep.subr.mxu0 0.0
        %719 = vmatpush1.msra.mxu0 %v682
        %720 = vmatprep.subr.mxu0 0.0
        %721 = vmatpush1.msra.mxu0 %v681
        %722 = vmatprep.subr.mxu0 0.0
        %723 = vmatpush1.msra.mxu0 %v680
        %724 = vmatprep.subr.mxu0 0.0
        %725 = vmatpush1.msra.mxu0 %v679
        %726 = vmatprep.subr.mxu0 0.0
        %727 = vmatpush1.msra.mxu0 %v678
        %728 = vmatprep.subr.mxu0 0.0
        %729 = vmatpush1.msra.mxu0 %v677
        %730 = vmatprep.subr.mxu0 0.0
        %731 = vmatpush1.msra.mxu0 %v676
        %732 = vmatprep.subr.mxu0 0.0
        %733 = vmatpush2.msra.mxu0 0.0
        %734 = vmatprep.subr.mxu0 0.0
        %735 = vmatpush2.msra.mxu0 0.0
        %736 = vmatprep.subr.mxu0 0.0
        %737 = vmatpush2.msra.mxu0 0.0
        %738 = vmatprep.subr.mxu0 0.0
        %739 = vmatpush2.msra.mxu0 0.0
        %740 = vmatprep.subr.mxu0 0.0
        %741 = vmatpush2.msra.mxu0 0.0
        %742 = vmatprep.subr.mxu0 0.0
        %743 = vmatpush2.msra.mxu0 0.0
        %744 = vmatprep.subr.mxu0 0.0
        %745 = vmatpush2.msra.mxu0 0.0
        %746 = vmatprep.subr.mxu0 0.0
        %747 = vmatpush2.msra.mxu0 0.0
        %748 = vmatprep.subr.mxu0 0.0
        %749 = vmatpush2.msra.mxu0 0.0
        %750 = vmatprep.subr.mxu0 0.0
        %751 = vmatpush2.msra.mxu0 0.0
        %752 = vmatprep.subr.mxu0 0.0
        %753 = vmatpush2.msra.mxu0 0.0
        %754 = vmatprep.subr.mxu0 0.0
        %755 = vmatpush2.msra.mxu0 0.0
        %756 = vmatprep.subr.mxu0 0.0
        %757 = vmatpush2.msra.mxu0 0.0
        %758 = vmatprep.subr.mxu0 0.0
        %759 = vmatpush2.msra.mxu0 0.0
        %760 = vmatprep.subr.mxu0 0.0
        %761 = vmatpush2.msra.mxu0 0.0
        %762 = vmatprep.subr.mxu0 0.0
        %763 = vmatpush2.msra.mxu0 0.0
        %764 = vmatprep.mubr.f32.mxu0 0.0
        %765 = vmatmul.mubr.f32.gmra.mxu0 %v674
        %v766 = vpop.f32.mrf.mxu0
        %v767 = vadd.f32 %v698, %v766
        %v768 = vpop.f32.mrf.mxu0
        %769 = vdwg.mxu0
        %vm770 = vcmp.gt.f32.partialorder %v767, 0.0
        %v771 = vmin.f32 %v767, 0.0
        %v772 = vmul.f32 %v771, 1.442695
        %v773 = vpow.pop %v772
        %v774 = vsub.f32 %v773, 1.0
        %v775 = vmul.f32 %v774, 1.6732632
        %v776 = vsel %vm770, %v767, %v775
        %v777 = vmul.f32 %v776, 1.050701
        %s778 = scalar_lea.vmem [#allocation2], 768
        %v779 = vld [vmem:[%s778] sm:$0xff]
        %v780 = vld [vmem:[%s778 + $0x8] sm:$0xff]
        %v781 = vld [vmem:[%s778 + $0x10] sm:$0xff]
        %v782 = vld [vmem:[%s778 + $0x18] sm:$0xff]
        %v783 = vld [vmem:[%s778 + $0x20] sm:$0xff]
        %v784 = vld [vmem:[%s778 + $0x28] sm:$0xff]
        %v785 = vld [vmem:[%s778 + $0x30] sm:$0xff]
        %v786 = vld [vmem:[%s778 + $0x38] sm:$0xff]
        %v787 = vld [vmem:[%s778 + $0x40] sm:$0xff]
        %v788 = vld [vmem:[%s778 + $0x48] sm:$0xff]
        %v789 = vld [vmem:[%s778 + $0x50] sm:$0xff]
        %v790 = vld [vmem:[%s778 + $0x58] sm:$0xff]
        %v791 = vld [vmem:[%s778 + $0x60] sm:$0xff]
        %v792 = vld [vmem:[%s778 + $0x68] sm:$0xff]
        %v793 = vld [vmem:[%s778 + $0x70] sm:$0xff]
        %v794 = vld [vmem:[%s778 + $0x78] sm:$0xff]
        %s795 = scalar_lea.vmem %s2, 5
        %v796 = vld [vmem:[%s795] sm:$0x1]
        %v798 = vlaneseq
        %v799 = vshrl.u32 %v798, 7
        %v800 = vsub.s32 0, %v799
        %v801 = vrot.slane %v796, %v800
        %803 = vmatprep.subr.mxu0 0.0
        %804 = vmatpush1.msra.mxu0 %v794
        %805 = vmatprep.subr.mxu0 0.0
        %806 = vmatpush1.msra.mxu0 %v793
        %807 = vmatprep.subr.mxu0 0.0
        %808 = vmatpush1.msra.mxu0 %v792
        %809 = vmatprep.subr.mxu0 0.0
        %810 = vmatpush1.msra.mxu0 %v791
        %811 = vmatprep.subr.mxu0 0.0
        %812 = vmatpush1.msra.mxu0 %v790
        %813 = vmatprep.subr.mxu0 0.0
        %814 = vmatpush1.msra.mxu0 %v789
        %815 = vmatprep.subr.mxu0 0.0
        %816 = vmatpush1.msra.mxu0 %v788
        %817 = vmatprep.subr.mxu0 0.0
        %818 = vmatpush1.msra.mxu0 %v787
        %819 = vmatprep.subr.mxu0 0.0
        %820 = vmatpush1.msra.mxu0 %v786
        %821 = vmatprep.subr.mxu0 0.0
        %822 = vmatpush1.msra.mxu0 %v785
        %823 = vmatprep.subr.mxu0 0.0
        %824 = vmatpush1.msra.mxu0 %v784
        %825 = vmatprep.subr.mxu0 0.0
        %826 = vmatpush1.msra.mxu0 %v783
        %827 = vmatprep.subr.mxu0 0.0
        %828 = vmatpush1.msra.mxu0 %v782
        %829 = vmatprep.subr.mxu0 0.0
        %830 = vmatpush1.msra.mxu0 %v781
        %831 = vmatprep.subr.mxu0 0.0
        %832 = vmatpush1.msra.mxu0 %v780
        %833 = vmatprep.subr.mxu0 0.0
        %834 = vmatpush1.msra.mxu0 %v779
        %835 = vmatprep.subr.mxu0 0.0
        %836 = vmatpush2.msra.mxu0 0.0
        %837 = vmatprep.subr.mxu0 0.0
        %838 = vmatpush2.msra.mxu0 0.0
        %839 = vmatprep.subr.mxu0 0.0
        %840 = vmatpush2.msra.mxu0 0.0
        %841 = vmatprep.subr.mxu0 0.0
        %842 = vmatpush2.msra.mxu0 0.0
        %843 = vmatprep.subr.mxu0 0.0
        %844 = vmatpush2.msra.mxu0 0.0
        %845 = vmatprep.subr.mxu0 0.0
        %846 = vmatpush2.msra.mxu0 0.0
        %847 = vmatprep.subr.mxu0 0.0
        %848 = vmatpush2.msra.mxu0 0.0
        %849 = vmatprep.subr.mxu0 0.0
        %850 = vmatpush2.msra.mxu0 0.0
        %851 = vmatprep.subr.mxu0 0.0
        %852 = vmatpush2.msra.mxu0 0.0
        %853 = vmatprep.subr.mxu0 0.0
        %854 = vmatpush2.msra.mxu0 0.0
        %855 = vmatprep.subr.mxu0 0.0
        %856 = vmatpush2.msra.mxu0 0.0
        %857 = vmatprep.subr.mxu0 0.0
        %858 = vmatpush2.msra.mxu0 0.0
        %859 = vmatprep.subr.mxu0 0.0
        %860 = vmatpush2.msra.mxu0 0.0
        %861 = vmatprep.subr.mxu0 0.0
        %862 = vmatpush2.msra.mxu0 0.0
        %863 = vmatprep.subr.mxu0 0.0
        %864 = vmatpush2.msra.mxu0 0.0
        %865 = vmatprep.subr.mxu0 0.0
        %866 = vmatpush2.msra.mxu0 0.0
        %867 = vmatprep.mubr.f32.mxu0 0.0
        %868 = vmatmul.mubr.f32.gmra.mxu0 %v777
        %v869 = vpop.f32.mrf.mxu0
        %v870 = vadd.f32 %v801, %v869
        %v871 = vpop.f32.mrf.mxu0
        %872 = vdwg.mxu0
        %873 = vst [vmem:[%s180] sm:$0xff] %v870
        %p874 = scmp.lt.s32.totalorder %s15, 1
        %s875 = scalar_select %p874, %s15, 1
        %s876 = smul.addr %s875, 8
        %s877 = scalar_lea.vmem %s3, %s876
        // Predicated region
        $region37: #{deepsets_apply.1} parent=31 // pred_check
          %p878 = pneg %p101
        $region38: #{deepsets_apply.1} parent=31 // pred_check_branch
          %880 = sbr.rel (%p878) target = $region40
        $region39: #{deepsets_apply.1} parent=31 // pred_region
          _
        $region40: #{deepsets_apply.1} parent=31 // pred_fallthru
          _
      $region32: #{deepsets_apply.1} parent=5 // pred_fallthru
        _
      %p881 = scmp.le.s32.totalorder 2, %s10
      // Predicated region
      $region41: #{deepsets_apply.1} parent=5 // pred_check
        %p882 = pneg %p881
      $region42: #{deepsets_apply.1} parent=5 // pred_check_branch
        %884 = sbr.rel (%p882) target = $region44
      $region43: #{deepsets_apply.1} parent=5 // pred_region
        %s885 = ssub.s32 %s10, 2
        // Predicated region
        $region45: #{deepsets_apply.1} parent=43 // pred_check
          %p886 = pneg %p107
        $region46: #{deepsets_apply.1} parent=43 // pred_check_branch
          %888 = sbr.rel (%p886) target = $region48
        $region47: #{deepsets_apply.1} parent=43 // pred_region
          %p889 = scmp.lt.s32.totalorder %s16, 1
          %s890 = scalar_select %p889, %s16, 1
          %s891 = smul.addr %s890, 8
          %s892 = scalar_lea.vmem %s3, %s891
        $region48: #{deepsets_apply.1} parent=43 // pred_fallthru
          _
      $region44: #{deepsets_apply.1} parent=5 // pred_fallthru
        _
    $region6: #{deepsets_apply.1} parent=1 // loop_footer
      %s14 = sadd.s32 1, %s10
    $region7: #{deepsets_apply.1} parent=1 // loop_footer_branch
      %9 = sbr.rel target = $region3
    $region8: #{deepsets_apply.1} parent=1 // loop_exit
      _
    %893 = vsyncpa [#allocation3], 1
    %s894 = scalar_lea.sflag [#allocation3], 1
    %895 = vsyncpa %s894, 1

</llo_original>
